<compile_context>
chip_gen: v5e
topology: v5e:2x2
jax: 0.10.0
libtpu: 0.0.40
codegen_flags: <defaults>
</compile_context>

<pallas_src>
import jax
import jax.numpy as jnp
from jax.experimental import pallas as pl
from jax.experimental.pallas import tpu as pltpu


def _round_up(a, b):
    return ((a + b - 1) // b) * b


def _outconv_kernel(w1_ref, w2_ref, x_ref, o_ref):
    # w1_ref: (C_mid, C_in)  f32 in SMEM   (fc1 weight, PyTorch [out, in] layout)
    # w2_ref: (C_out, C_mid) f32 in SMEM   (fc2 weight)
    # x_ref:  (C_in, TL)  VMEM tile — channels on sublanes, pixels on lanes
    # o_ref:  (C_out, TL) VMEM tile — lane-dense output
    c_mid, c_in = w1_ref.shape
    c_out = w2_ref.shape[0]

    x = x_ref[...].astype(jnp.float32)                    # (C_in, TL)

    # fc1 (1x1 conv, no bias) + ReLU as unrolled VPU broadcast-FMAs.
    h = []
    for o in range(c_mid):
        acc = w1_ref[o, 0] * x[0:1, :]
        for i in range(1, c_in):
            acc = acc + w1_ref[o, i] * x[i:i + 1, :]
        h.append(jnp.maximum(acc, 0.0))                    # (1, TL)

    # fc2 (1x1 conv, no bias).
    logits = []
    for o in range(c_out):
        acc = w2_ref[o, 0] * h[0]
        for i in range(1, c_mid):
            acc = acc + w2_ref[o, i] * h[i]
        logits.append(acc)                                 # (1, TL)

    # Channel softmax (PyTorch dim=1): reduce across the C_out rows, per pixel.
    m = logits[0]
    for o in range(1, c_out):
        m = jnp.maximum(m, logits[o])
    e = [jnp.exp(l - m) for l in logits]                   # EUP
    denom = e[0]
    for o in range(1, c_out):
        denom = denom + e[o]

    # Reciprocal on the EUP + one Newton-Raphson step for full f32 accuracy.
    inv = pl.reciprocal(denom, approx=True)
    inv = inv * (2.0 - denom * inv)

    for o in range(c_out):
        o_ref[o:o + 1, :] = (e[o] * inv).astype(o_ref.dtype)


def outconv_forward(x_nchw, w1, w2, *, max_tile_l=32 * 1024):
    """x_nchw: (N, C_in, H, W); w1: (C_mid, C_in); w2: (C_out, C_mid)."""
    N, C_in, H, W = x_nchw.shape
    C_out = w2.shape[0]
    HW = H * W

    # NCHW is already channel-major for this layout: merging H and W is a free
    # reshape — no transpose, no extra HBM traffic.
    x = x_nchw.reshape(N, C_in, HW)

    # Spatial (lane) tile: multiple of 128, capped at max_tile_l pixels.
    TL = min(_round_up(HW, 128), max_tile_l)
    grid = (N, pl.cdiv(HW, TL))

    # Cast weights once here (not per grid step inside the kernel).
    w1f = w1.astype(jnp.float32)
    w2f = w2.astype(jnp.float32)

    out = pl.pallas_call(
        _outconv_kernel,
        out_shape=jax.ShapeDtypeStruct((N, C_out, HW), x_nchw.dtype),
        grid=grid,
        in_specs=[
            pl.BlockSpec(memory_space=pltpu.MemorySpace.SMEM),       # w1 (tiny)
            pl.BlockSpec(memory_space=pltpu.MemorySpace.SMEM),       # w2 (tiny)
            pl.BlockSpec((None, C_in, TL), lambda n, l: (n, 0, l)),  # x tile
        ],
        out_specs=pl.BlockSpec((None, C_out, TL), lambda n, l: (n, 0, l)),
        compiler_params=pltpu.CompilerParams(
            dimension_semantics=("parallel", "parallel")),
    )(w1f, w2f, x)

    return out.reshape(N, C_out, H, W)


def _reference(x_nchw, w1, w2):
    # Pure-JAX reference matching PyTorch OutConv.forward.
    y = jnp.einsum('oi,nihw->nohw', w1, x_nchw)
    y = jnp.maximum(y, 0.0)
    y = jnp.einsum('oi,nihw->nohw', w2, y)
    return jax.nn.softmax(y, axis=1)


if __name__ == "__main__":
    key = jax.random.PRNGKey(0)
    k_x, k_w1, k_w2 = jax.random.split(key, 3)

    N, C_in, H, W = 2, 4, 16, 16
    C_out = 4  # OutConv hardcodes out_channels = 4

    x = jax.random.normal(k_x, (N, C_in, H, W), dtype=jnp.float32)
    # Deterministic "kaiming-ish" init for the 1x1 conv weights (out, in).
    w1 = jax.random.normal(k_w1, (C_in, C_in), dtype=jnp.float32) * (1.0 / C_in) ** 0.5
    w2 = jax.random.normal(k_w2, (C_out, C_in), dtype=jnp.float32) * (1.0 / C_in) ** 0.5

    out = jax.block_until_ready(outconv_forward(x, w1, w2))

    ref = _reference(x, w1, w2)
    assert out.shape == (N, C_out, H, W)
    assert bool(jnp.allclose(out, ref, atol=1e-4, rtol=1e-4))

    print("KERNEL_OK")
</pallas_src>

<mosaic_0001>
module attributes {stable_mosaic.version = 11 : i64} {
  func.func @_outconv_kernel(%arg0: i32, %arg1: i32, %arg2: memref<4x4xf32, #tpu.memory_space<smem>>, %arg3: memref<4x4xf32, #tpu.memory_space<smem>>, %arg4: memref<1x4x256xf32, #tpu.memory_space<vmem>>, %arg5: memref<1x4x256xf32, #tpu.memory_space<vmem>>) attributes {dimension_semantics = [#tpu.dimension_semantics<parallel>, #tpu.dimension_semantics<parallel>], iteration_bounds = array<i64: 2, 1>, scalar_prefetch = 0 : i64, scratch_operands = 0 : i64, tpu.core_type = #tpu.core_type<tc>, window_params = [{transform_indices = @transform_0, window_bounds = array<i64: 4, 4>}, {transform_indices = @transform_1, window_bounds = array<i64: 4, 4>}, {transform_indices = @transform_2, window_bounds = array<i64: 1, 4, 256>}, {transform_indices = @transform_3, window_bounds = array<i64: 1, 4, 256>}]} {
    %c0 = arith.constant 0 : index
    %c0_0 = arith.constant 0 : index
    %c0_1 = arith.constant 0 : index
    %0 = vector.load %arg4[%c0, %c0_0, %c0_1] : memref<1x4x256xf32, #tpu.memory_space<vmem>>, vector<1x4x256xf32>
    %1 = vector.shape_cast %0 : vector<1x4x256xf32> to vector<4x256xf32>
    %c0_2 = arith.constant 0 : index
    %c0_3 = arith.constant 0 : index
    %2 = memref.load %arg2[%c0_2, %c0_3] : memref<4x4xf32, #tpu.memory_space<smem>>
    %3 = vector.extract_strided_slice %1 {offsets = [0, 0], sizes = [1, 256], strides = [1, 1]} : vector<4x256xf32> to vector<1x256xf32>
    %4 = vector.broadcast %2 : f32 to vector<1x256xf32>
    %5 = arith.mulf %4, %3 : vector<1x256xf32>
    %c0_4 = arith.constant 0 : index
    %c1 = arith.constant 1 : index
    %6 = memref.load %arg2[%c0_4, %c1] : memref<4x4xf32, #tpu.memory_space<smem>>
    %7 = vector.extract_strided_slice %1 {offsets = [1, 0], sizes = [1, 256], strides = [1, 1]} : vector<4x256xf32> to vector<1x256xf32>
    %8 = vector.broadcast %6 : f32 to vector<1x256xf32>
    %9 = arith.mulf %8, %7 : vector<1x256xf32>
    %10 = arith.addf %5, %9 : vector<1x256xf32>
    %c0_5 = arith.constant 0 : index
    %c2 = arith.constant 2 : index
    %11 = memref.load %arg2[%c0_5, %c2] : memref<4x4xf32, #tpu.memory_space<smem>>
    %12 = vector.extract_strided_slice %1 {offsets = [2, 0], sizes = [1, 256], strides = [1, 1]} : vector<4x256xf32> to vector<1x256xf32>
    %13 = vector.broadcast %11 : f32 to vector<1x256xf32>
    %14 = arith.mulf %13, %12 : vector<1x256xf32>
    %15 = arith.addf %10, %14 : vector<1x256xf32>
    %c0_6 = arith.constant 0 : index
    %c3 = arith.constant 3 : index
    %16 = memref.load %arg2[%c0_6, %c3] : memref<4x4xf32, #tpu.memory_space<smem>>
    %17 = vector.extract_strided_slice %1 {offsets = [3, 0], sizes = [1, 256], strides = [1, 1]} : vector<4x256xf32> to vector<1x256xf32>
    %18 = vector.broadcast %16 : f32 to vector<1x256xf32>
    %19 = arith.mulf %18, %17 : vector<1x256xf32>
    %20 = arith.addf %15, %19 : vector<1x256xf32>
    %cst = arith.constant 0.000000e+00 : f32
    %21 = vector.broadcast %cst : f32 to vector<1x256xf32>
    %22 = arith.maximumf %20, %21 : vector<1x256xf32>
    %c1_7 = arith.constant 1 : index
    %c0_8 = arith.constant 0 : index
    %23 = memref.load %arg2[%c1_7, %c0_8] : memref<4x4xf32, #tpu.memory_space<smem>>
    %24 = vector.extract_strided_slice %1 {offsets = [0, 0], sizes = [1, 256], strides = [1, 1]} : vector<4x256xf32> to vector<1x256xf32>
    %25 = vector.broadcast %23 : f32 to vector<1x256xf32>
    %26 = arith.mulf %25, %24 : vector<1x256xf32>
    %c1_9 = arith.constant 1 : index
    %c1_10 = arith.constant 1 : index
    %27 = memref.load %arg2[%c1_9, %c1_10] : memref<4x4xf32, #tpu.memory_space<smem>>
    %28 = vector.extract_strided_slice %1 {offsets = [1, 0], sizes = [1, 256], strides = [1, 1]} : vector<4x256xf32> to vector<1x256xf32>
    %29 = vector.broadcast %27 : f32 to vector<1x256xf32>
    %30 = arith.mulf %29, %28 : vector<1x256xf32>
    %31 = arith.addf %26, %30 : vector<1x256xf32>
    %c1_11 = arith.constant 1 : index
    %c2_12 = arith.constant 2 : index
    %32 = memref.load %arg2[%c1_11, %c2_12] : memref<4x4xf32, #tpu.memory_space<smem>>
    %33 = vector.extract_strided_slice %1 {offsets = [2, 0], sizes = [1, 256], strides = [1, 1]} : vector<4x256xf32> to vector<1x256xf32>
    %34 = vector.broadcast %32 : f32 to vector<1x256xf32>
    %35 = arith.mulf %34, %33 : vector<1x256xf32>
    %36 = arith.addf %31, %35 : vector<1x256xf32>
    %c1_13 = arith.constant 1 : index
    %c3_14 = arith.constant 3 : index
    %37 = memref.load %arg2[%c1_13, %c3_14] : memref<4x4xf32, #tpu.memory_space<smem>>
    %38 = vector.extract_strided_slice %1 {offsets = [3, 0], sizes = [1, 256], strides = [1, 1]} : vector<4x256xf32> to vector<1x256xf32>
    %39 = vector.broadcast %37 : f32 to vector<1x256xf32>
    %40 = arith.mulf %39, %38 : vector<1x256xf32>
    %41 = arith.addf %36, %40 : vector<1x256xf32>
    %cst_15 = arith.constant 0.000000e+00 : f32
    %42 = vector.broadcast %cst_15 : f32 to vector<1x256xf32>
    %43 = arith.maximumf %41, %42 : vector<1x256xf32>
    %c2_16 = arith.constant 2 : index
    %c0_17 = arith.constant 0 : index
    %44 = memref.load %arg2[%c2_16, %c0_17] : memref<4x4xf32, #tpu.memory_space<smem>>
    %45 = vector.extract_strided_slice %1 {offsets = [0, 0], sizes = [1, 256], strides = [1, 1]} : vector<4x256xf32> to vector<1x256xf32>
    %46 = vector.broadcast %44 : f32 to vector<1x256xf32>
    %47 = arith.mulf %46, %45 : vector<1x256xf32>
    %c2_18 = arith.constant 2 : index
    %c1_19 = arith.constant 1 : index
    %48 = memref.load %arg2[%c2_18, %c1_19] : memref<4x4xf32, #tpu.memory_space<smem>>
    %49 = vector.extract_strided_slice %1 {offsets = [1, 0], sizes = [1, 256], strides = [1, 1]} : vector<4x256xf32> to vector<1x256xf32>
    %50 = vector.broadcast %48 : f32 to vector<1x256xf32>
    %51 = arith.mulf %50, %49 : vector<1x256xf32>
    %52 = arith.addf %47, %51 : vector<1x256xf32>
    %c2_20 = arith.constant 2 : index
    %c2_21 = arith.constant 2 : index
    %53 = memref.load %arg2[%c2_20, %c2_21] : memref<4x4xf32, #tpu.memory_space<smem>>
    %54 = vector.extract_strided_slice %1 {offsets = [2, 0], sizes = [1, 256], strides = [1, 1]} : vector<4x256xf32> to vector<1x256xf32>
    %55 = vector.broadcast %53 : f32 to vector<1x256xf32>
    %56 = arith.mulf %55, %54 : vector<1x256xf32>
    %57 = arith.addf %52, %56 : vector<1x256xf32>
    %c2_22 = arith.constant 2 : index
    %c3_23 = arith.constant 3 : index
    %58 = memref.load %arg2[%c2_22, %c3_23] : memref<4x4xf32, #tpu.memory_space<smem>>
    %59 = vector.extract_strided_slice %1 {offsets = [3, 0], sizes = [1, 256], strides = [1, 1]} : vector<4x256xf32> to vector<1x256xf32>
    %60 = vector.broadcast %58 : f32 to vector<1x256xf32>
    %61 = arith.mulf %60, %59 : vector<1x256xf32>
    %62 = arith.addf %57, %61 : vector<1x256xf32>
    %cst_24 = arith.constant 0.000000e+00 : f32
    %63 = vector.broadcast %cst_24 : f32 to vector<1x256xf32>
    %64 = arith.maximumf %62, %63 : vector<1x256xf32>
    %c3_25 = arith.constant 3 : index
    %c0_26 = arith.constant 0 : index
    %65 = memref.load %arg2[%c3_25, %c0_26] : memref<4x4xf32, #tpu.memory_space<smem>>
    %66 = vector.extract_strided_slice %1 {offsets = [0, 0], sizes = [1, 256], strides = [1, 1]} : vector<4x256xf32> to vector<1x256xf32>
    %67 = vector.broadcast %65 : f32 to vector<1x256xf32>
    %68 = arith.mulf %67, %66 : vector<1x256xf32>
    %c3_27 = arith.constant 3 : index
    %c1_28 = arith.constant 1 : index
    %69 = memref.load %arg2[%c3_27, %c1_28] : memref<4x4xf32, #tpu.memory_space<smem>>
    %70 = vector.extract_strided_slice %1 {offsets = [1, 0], sizes = [1, 256], strides = [1, 1]} : vector<4x256xf32> to vector<1x256xf32>
    %71 = vector.broadcast %69 : f32 to vector<1x256xf32>
    %72 = arith.mulf %71, %70 : vector<1x256xf32>
    %73 = arith.addf %68, %72 : vector<1x256xf32>
    %c3_29 = arith.constant 3 : index
    %c2_30 = arith.constant 2 : index
    %74 = memref.load %arg2[%c3_29, %c2_30] : memref<4x4xf32, #tpu.memory_space<smem>>
    %75 = vector.extract_strided_slice %1 {offsets = [2, 0], sizes = [1, 256], strides = [1, 1]} : vector<4x256xf32> to vector<1x256xf32>
    %76 = vector.broadcast %74 : f32 to vector<1x256xf32>
    %77 = arith.mulf %76, %75 : vector<1x256xf32>
    %78 = arith.addf %73, %77 : vector<1x256xf32>
    %c3_31 = arith.constant 3 : index
    %c3_32 = arith.constant 3 : index
    %79 = memref.load %arg2[%c3_31, %c3_32] : memref<4x4xf32, #tpu.memory_space<smem>>
    %80 = vector.extract_strided_slice %1 {offsets = [3, 0], sizes = [1, 256], strides = [1, 1]} : vector<4x256xf32> to vector<1x256xf32>
    %81 = vector.broadcast %79 : f32 to vector<1x256xf32>
    %82 = arith.mulf %81, %80 : vector<1x256xf32>
    %83 = arith.addf %78, %82 : vector<1x256xf32>
    %cst_33 = arith.constant 0.000000e+00 : f32
    %84 = vector.broadcast %cst_33 : f32 to vector<1x256xf32>
    %85 = arith.maximumf %83, %84 : vector<1x256xf32>
    %c0_34 = arith.constant 0 : index
    %c0_35 = arith.constant 0 : index
    %86 = memref.load %arg3[%c0_34, %c0_35] : memref<4x4xf32, #tpu.memory_space<smem>>
    %87 = vector.broadcast %86 : f32 to vector<1x256xf32>
    %88 = arith.mulf %87, %22 : vector<1x256xf32>
    %c0_36 = arith.constant 0 : index
    %c1_37 = arith.constant 1 : index
    %89 = memref.load %arg3[%c0_36, %c1_37] : memref<4x4xf32, #tpu.memory_space<smem>>
    %90 = vector.broadcast %89 : f32 to vector<1x256xf32>
    %91 = arith.mulf %90, %43 : vector<1x256xf32>
    %92 = arith.addf %88, %91 : vector<1x256xf32>
    %c0_38 = arith.constant 0 : index
    %c2_39 = arith.constant 2 : index
    %93 = memref.load %arg3[%c0_38, %c2_39] : memref<4x4xf32, #tpu.memory_space<smem>>
    %94 = vector.broadcast %93 : f32 to vector<1x256xf32>
    %95 = arith.mulf %94, %64 : vector<1x256xf32>
    %96 = arith.addf %92, %95 : vector<1x256xf32>
    %c0_40 = arith.constant 0 : index
    %c3_41 = arith.constant 3 : index
    %97 = memref.load %arg3[%c0_40, %c3_41] : memref<4x4xf32, #tpu.memory_space<smem>>
    %98 = vector.broadcast %97 : f32 to vector<1x256xf32>
    %99 = arith.mulf %98, %85 : vector<1x256xf32>
    %100 = arith.addf %96, %99 : vector<1x256xf32>
    %c1_42 = arith.constant 1 : index
    %c0_43 = arith.constant 0 : index
    %101 = memref.load %arg3[%c1_42, %c0_43] : memref<4x4xf32, #tpu.memory_space<smem>>
    %102 = vector.broadcast %101 : f32 to vector<1x256xf32>
    %103 = arith.mulf %102, %22 : vector<1x256xf32>
    %c1_44 = arith.constant 1 : index
    %c1_45 = arith.constant 1 : index
    %104 = memref.load %arg3[%c1_44, %c1_45] : memref<4x4xf32, #tpu.memory_space<smem>>
    %105 = vector.broadcast %104 : f32 to vector<1x256xf32>
    %106 = arith.mulf %105, %43 : vector<1x256xf32>
    %107 = arith.addf %103, %106 : vector<1x256xf32>
    %c1_46 = arith.constant 1 : index
    %c2_47 = arith.constant 2 : index
    %108 = memref.load %arg3[%c1_46, %c2_47] : memref<4x4xf32, #tpu.memory_space<smem>>
    %109 = vector.broadcast %108 : f32 to vector<1x256xf32>
    %110 = arith.mulf %109, %64 : vector<1x256xf32>
    %111 = arith.addf %107, %110 : vector<1x256xf32>
    %c1_48 = arith.constant 1 : index
    %c3_49 = arith.constant 3 : index
    %112 = memref.load %arg3[%c1_48, %c3_49] : memref<4x4xf32, #tpu.memory_space<smem>>
    %113 = vector.broadcast %112 : f32 to vector<1x256xf32>
    %114 = arith.mulf %113, %85 : vector<1x256xf32>
    %115 = arith.addf %111, %114 : vector<1x256xf32>
    %c2_50 = arith.constant 2 : index
    %c0_51 = arith.constant 0 : index
    %116 = memref.load %arg3[%c2_50, %c0_51] : memref<4x4xf32, #tpu.memory_space<smem>>
    %117 = vector.broadcast %116 : f32 to vector<1x256xf32>
    %118 = arith.mulf %117, %22 : vector<1x256xf32>
    %c2_52 = arith.constant 2 : index
    %c1_53 = arith.constant 1 : index
    %119 = memref.load %arg3[%c2_52, %c1_53] : memref<4x4xf32, #tpu.memory_space<smem>>
    %120 = vector.broadcast %119 : f32 to vector<1x256xf32>
    %121 = arith.mulf %120, %43 : vector<1x256xf32>
    %122 = arith.addf %118, %121 : vector<1x256xf32>
    %c2_54 = arith.constant 2 : index
    %c2_55 = arith.constant 2 : index
    %123 = memref.load %arg3[%c2_54, %c2_55] : memref<4x4xf32, #tpu.memory_space<smem>>
    %124 = vector.broadcast %123 : f32 to vector<1x256xf32>
    %125 = arith.mulf %124, %64 : vector<1x256xf32>
    %126 = arith.addf %122, %125 : vector<1x256xf32>
    %c2_56 = arith.constant 2 : index
    %c3_57 = arith.constant 3 : index
    %127 = memref.load %arg3[%c2_56, %c3_57] : memref<4x4xf32, #tpu.memory_space<smem>>
    %128 = vector.broadcast %127 : f32 to vector<1x256xf32>
    %129 = arith.mulf %128, %85 : vector<1x256xf32>
    %130 = arith.addf %126, %129 : vector<1x256xf32>
    %c3_58 = arith.constant 3 : index
    %c0_59 = arith.constant 0 : index
    %131 = memref.load %arg3[%c3_58, %c0_59] : memref<4x4xf32, #tpu.memory_space<smem>>
    %132 = vector.broadcast %131 : f32 to vector<1x256xf32>
    %133 = arith.mulf %132, %22 : vector<1x256xf32>
    %c3_60 = arith.constant 3 : index
    %c1_61 = arith.constant 1 : index
    %134 = memref.load %arg3[%c3_60, %c1_61] : memref<4x4xf32, #tpu.memory_space<smem>>
    %135 = vector.broadcast %134 : f32 to vector<1x256xf32>
    %136 = arith.mulf %135, %43 : vector<1x256xf32>
    %137 = arith.addf %133, %136 : vector<1x256xf32>
    %c3_62 = arith.constant 3 : index
    %c2_63 = arith.constant 2 : index
    %138 = memref.load %arg3[%c3_62, %c2_63] : memref<4x4xf32, #tpu.memory_space<smem>>
    %139 = vector.broadcast %138 : f32 to vector<1x256xf32>
    %140 = arith.mulf %139, %64 : vector<1x256xf32>
    %141 = arith.addf %137, %140 : vector<1x256xf32>
    %c3_64 = arith.constant 3 : index
    %c3_65 = arith.constant 3 : index
    %142 = memref.load %arg3[%c3_64, %c3_65] : memref<4x4xf32, #tpu.memory_space<smem>>
    %143 = vector.broadcast %142 : f32 to vector<1x256xf32>
    %144 = arith.mulf %143, %85 : vector<1x256xf32>
    %145 = arith.addf %141, %144 : vector<1x256xf32>
    %146 = arith.maximumf %100, %115 : vector<1x256xf32>
    %147 = arith.maximumf %146, %130 : vector<1x256xf32>
    %148 = arith.maximumf %147, %145 : vector<1x256xf32>
    %149 = arith.subf %100, %148 : vector<1x256xf32>
    %150 = math.exp %149 : vector<1x256xf32>
    %151 = arith.subf %115, %148 : vector<1x256xf32>
    %152 = math.exp %151 : vector<1x256xf32>
    %153 = arith.subf %130, %148 : vector<1x256xf32>
    %154 = math.exp %153 : vector<1x256xf32>
    %155 = arith.subf %145, %148 : vector<1x256xf32>
    %156 = math.exp %155 : vector<1x256xf32>
    %157 = arith.addf %150, %152 : vector<1x256xf32>
    %158 = arith.addf %157, %154 : vector<1x256xf32>
    %159 = arith.addf %158, %156 : vector<1x256xf32>
    %160 = tpu.reciprocal %159 {approx = true} : vector<1x256xf32> -> vector<1x256xf32>
    %161 = arith.mulf %159, %160 : vector<1x256xf32>
    %cst_66 = arith.constant 2.000000e+00 : f32
    %162 = vector.broadcast %cst_66 : f32 to vector<1x256xf32>
    %163 = arith.subf %162, %161 : vector<1x256xf32>
    %164 = arith.mulf %160, %163 : vector<1x256xf32>
    %165 = arith.mulf %150, %164 : vector<1x256xf32>
    %c0_67 = arith.constant 0 : index
    %c0_68 = arith.constant 0 : index
    %c0_69 = arith.constant 0 : index
    %166 = vector.load %arg5[%c0_67, %c0_68, %c0_69] : memref<1x4x256xf32, #tpu.memory_space<vmem>>, vector<1x1x256xf32>
    %167 = vector.shape_cast %166 : vector<1x1x256xf32> to vector<1x256xf32>
    %168 = vector.shape_cast %165 : vector<1x256xf32> to vector<1x1x256xf32>
    tpu.vector_store %arg5[%c0_67, %c0_68, %c0_69], %168 {strides = array<i32>} : memref<1x4x256xf32, #tpu.memory_space<vmem>>, vector<1x1x256xf32>,
    %169 = arith.mulf %152, %164 : vector<1x256xf32>
    %c0_70 = arith.constant 0 : index
    %c1_71 = arith.constant 1 : index
    %c0_72 = arith.constant 0 : index
    %170 = vector.load %arg5[%c0_70, %c1_71, %c0_72] : memref<1x4x256xf32, #tpu.memory_space<vmem>>, vector<1x1x256xf32>
    %171 = vector.shape_cast %170 : vector<1x1x256xf32> to vector<1x256xf32>
    %172 = vector.shape_cast %169 : vector<1x256xf32> to vector<1x1x256xf32>
    tpu.vector_store %arg5[%c0_70, %c1_71, %c0_72], %172 {strides = array<i32>} : memref<1x4x256xf32, #tpu.memory_space<vmem>>, vector<1x1x256xf32>,
    %173 = arith.mulf %154, %164 : vector<1x256xf32>
    %c0_73 = arith.constant 0 : index
    %c2_74 = arith.constant 2 : index
    %c0_75 = arith.constant 0 : index
    %174 = vector.load %arg5[%c0_73, %c2_74, %c0_75] : memref<1x4x256xf32, #tpu.memory_space<vmem>>, vector<1x1x256xf32>
    %175 = vector.shape_cast %174 : vector<1x1x256xf32> to vector<1x256xf32>
    %176 = vector.shape_cast %173 : vector<1x256xf32> to vector<1x1x256xf32>
    tpu.vector_store %arg5[%c0_73, %c2_74, %c0_75], %176 {strides = array<i32>} : memref<1x4x256xf32, #tpu.memory_space<vmem>>, vector<1x1x256xf32>,
    %177 = arith.mulf %156, %164 : vector<1x256xf32>
    %c0_76 = arith.constant 0 : index
    %c3_77 = arith.constant 3 : index
    %c0_78 = arith.constant 0 : index
    %178 = vector.load %arg5[%c0_76, %c3_77, %c0_78] : memref<1x4x256xf32, #tpu.memory_space<vmem>>, vector<1x1x256xf32>
    %179 = vector.shape_cast %178 : vector<1x1x256xf32> to vector<1x256xf32>
    %180 = vector.shape_cast %177 : vector<1x256xf32> to vector<1x1x256xf32>
    tpu.vector_store %arg5[%c0_76, %c3_77, %c0_78], %180 {strides = array<i32>} : memref<1x4x256xf32, #tpu.memory_space<vmem>>, vector<1x1x256xf32>,
    return
  }
  func.func @transform_0(%arg0: i32, %arg1: i32) -> (i32, i32) {
    %c0_i32 = arith.constant 0 : i32
    %c0_i32_0 = arith.constant 0 : i32
    %c0_i32_1 = arith.constant 0 : i32
    return %c0_i32, %c0_i32_0 : i32, i32
  }
  func.func @transform_1(%arg0: i32, %arg1: i32) -> (i32, i32) {
    %c0_i32 = arith.constant 0 : i32
    %c0_i32_0 = arith.constant 0 : i32
    %c0_i32_1 = arith.constant 0 : i32
    return %c0_i32, %c0_i32_0 : i32, i32
  }
  func.func @transform_2(%arg0: i32, %arg1: i32) -> (i32, i32, i32) {
    %c0_i32 = arith.constant 0 : i32
    %c0_i32_0 = arith.constant 0 : i32
    return %arg0, %c0_i32, %arg1 : i32, i32, i32
  }
  func.func @transform_3(%arg0: i32, %arg1: i32) -> (i32, i32, i32) {
    %c0_i32 = arith.constant 0 : i32
    %c0_i32_0 = arith.constant 0 : i32
    return %arg0, %c0_i32, %arg1 : i32, i32, i32
  }
}

</mosaic_0001>

<llo_original>
// kernel: tpu_custom_call.1
$region0: #{tpu_custom_call.1}
  #allocation0 [shape = 'u32[]', space=smem, size = 0x4, offset = 0x4, fixed_abs, tag = 'smem constant byte address 0x4 - core index']
  #allocation1 [shape = 'u32[72,128]{1,0:T(1,128)}', space=vmem, size = 0x9000, scoped, tag = 'internal scratch']
  %s0 = inlined_call_operand.hbm [shape: f32[4,4], index: 0, kind: input, shape index: {}]
  %s1 = inlined_call_operand.hbm [shape: f32[4,4], index: 1, kind: input, shape index: {}]
  %s2 = inlined_call_operand.hbm [shape: f32[2,4,256], index: 2, kind: input, shape index: {}]
  %s3 = inlined_call_operand.hbm [shape: f32[2,4,256], index: 3, kind: output, shape index: {}]
  %s4 = sld [smem:[#allocation0]]
  $region57: #{tpu_custom_call.1} parent=0
    _
  %s6 = ssub.s32 1, %s4
  %s7 = scalar_select 0, %s6, %s4
  $region1: #{tpu_custom_call.1} parent=0
    #allocation2 [shape = 'u8[2048]{0}', space=smem, size = 0x800, scoped, tag = 'input window, operand 0, single buffered']
    #allocation3 [shape = 's32[2]{0}', space=sflag, size = 0x8, scoped, tag = 'scoped memory for tpu_custom_call.1']
    #allocation4 [shape = 's32[2]{0}', space=sflag, size = 0x8, scoped, tag = 'scoped memory for tpu_custom_call.1']
    #allocation5 [shape = 's32[2]{0}', space=sflag, size = 0x8, scoped, tag = 'scoped memory for tpu_custom_call.1']
    #allocation6 [shape = 'u8[2048]{0}', space=smem, size = 0x800, scoped, tag = 'input window, operand 1, single buffered']
    #allocation7 [shape = 's32[1]{0}', space=sflag, size = 0x4, scoped, tag = 'scoped memory for tpu_custom_call.1']
    #allocation8 [shape = 'u8[8192]{0}', space=vmem, size = 0x2000, scoped, tag = 'input window, operand 2']
    #allocation9 [shape = 'u8[8192]{0}', space=vmem, size = 0x2000, scoped, tag = 'output window, operand 0']
    %8 = vsyncpa [#allocation5], 0
    %9 = vsyncpa [#allocation7], 0
    %10 = vsyncpa [#allocation3], 0
    %s11 = scalar_lea.sflag [#allocation3], 1
    %12 = vsyncpa %s11, 0
    %13 = vsyncpa [#allocation4], 0
    %s14 = scalar_lea.sflag [#allocation4], 1
    %15 = vsyncpa %s14, 0
    loop: start=0, step=1, limit=4
    $region2: #{tpu_custom_call.1} parent=1 // loop_pre_header
      _
    $region3: #{tpu_custom_call.1} parent=1 // loop_header
      %s17 = sphi 0, %s21
      %p18 = scmp.ge.s32.totalorder %s17, 4
      %s24 = sphi 0, %s36
      %s25 = sphi 0, %s32
      %s26 = sphi 0, %s24
      %s27 = sphi 0, %s25
      %s28 = sphi 0, %s26
      %s29 = sphi 0, %s27
      %s37 = sphi 0, %s37
      %s39 = sphi 0, %s37
      %s40 = sphi 0, %s39
      %s54 = sphi 0, %s40
      %s58 = sphi 0, %s58
      %s60 = sphi 0, %s58
      %s61 = sphi 0, %s60
      %s75 = sphi 0, %s61
      %s83 = sphi 0, %s85
      %s86 = sphi 0, %s83
      %s87 = sphi 0, %s86
      %s103 = sphi 0, %s87
      %s111 = sphi 0, %s113
      %s114 = sphi 0, %s111
      %s115 = sphi 0, %s114
      %s131 = sphi 0, %s115
    $region4: #{tpu_custom_call.1} parent=1 // loop_header_branch
      %20 = sbr.rel (%p18) target = $region8
    $region5: #{tpu_custom_call.1} parent=1 // loop_body
      %s22 = ssub.s32 %s17, 1
      %s23 = ssub.s32 %s17, 2
      %s30 = sadd.s32 1, %s25
      %p31 = scmp.ge.s32.totalorder %s30, 1
      %s32 = scalar_select %p31, 0, %s30
      %s33 = sadd.s32 1, %s24
      %s34 = scalar_select %p31, %s33, %s24
      %p35 = scmp.ge.s32.totalorder %s34, 2
      %s36 = scalar_select %p35, 0, %s34
      %s38 = sadd.s32 %s37, 1
      %p41 = scmp.eq.s32.totalorder %s17, 1
      %p42 = scmp.ne.s32.totalorder %s37, %s39
      %p43 = scmp.eq.s32.totalorder %s17, 0
      %p44 = por %p42, %p43
      %p45 = scmp.ne.s32.totalorder %s37, %s39
      %p46 = scmp.eq.s32.totalorder %s22, 1
      %p47 = por %p45, %p46
      %p48 = scmp.ne.s32.totalorder %s39, %s40
      %p49 = scmp.eq.s32.totalorder %s22, 0
      %p50 = por %p48, %p49
      %p51 = scmp.ne.s32.totalorder %s39, %s40
      %p52 = scmp.eq.s32.totalorder %s23, 1
      %p53 = por %p51, %p52
      %p55 = scmp.ne.s32.totalorder %s40, %s54
      %p56 = scmp.eq.s32.totalorder %s23, 0
      %p57 = por %p55, %p56
      %s59 = sadd.s32 %s58, 1
      %p62 = scmp.eq.s32.totalorder %s17, 1
      %p63 = scmp.ne.s32.totalorder %s58, %s60
      %p64 = scmp.eq.s32.totalorder %s17, 0
      %p65 = por %p63, %p64
      %p66 = scmp.ne.s32.totalorder %s58, %s60
      %p67 = scmp.eq.s32.totalorder %s22, 1
      %p68 = por %p66, %p67
      %p69 = scmp.ne.s32.totalorder %s60, %s61
      %p70 = scmp.eq.s32.totalorder %s22, 0
      %p71 = por %p69, %p70
      %p72 = scmp.ne.s32.totalorder %s60, %s61
      %p73 = scmp.eq.s32.totalorder %s23, 1
      %p74 = por %p72, %p73
      %p76 = scmp.ne.s32.totalorder %s61, %s75
      %p77 = scmp.eq.s32.totalorder %s23, 0
      %p78 = por %p76, %p77
      %s79 = ssub.s32 %s24, %s36
      %s80 = ssub.s32 %s25, %s32
      %s81 = sor.u32 %s79, %s80
      %p82 = scmp.eq.s32.totalorder %s81, 0
      %s84 = sadd.s32 %s83, 1
      %s85 = scalar_select %p82, %s83, %s84
      %p88 = pneg %p82
      %p89 = scmp.eq.s32.totalorder %s17, 1
      %p90 = por %p88, %p89
      %p91 = scmp.ne.s32.totalorder %s83, %s86
      %p92 = scmp.eq.s32.totalorder %s17, 0
      %p93 = por %p91, %p92
      %p94 = scmp.ne.s32.totalorder %s83, %s86
      %p95 = scmp.eq.s32.totalorder %s22, 1
      %p96 = por %p94, %p95
      %p97 = scmp.ne.s32.totalorder %s86, %s87
      %p98 = scmp.eq.s32.totalorder %s22, 0
      %p99 = por %p97, %p98
      %p100 = scmp.ne.s32.totalorder %s86, %s87
      %p101 = scmp.eq.s32.totalorder %s23, 1
      %p102 = por %p100, %p101
      %p104 = scmp.ne.s32.totalorder %s87, %s103
      %p105 = scmp.eq.s32.totalorder %s23, 0
      %p106 = por %p104, %p105
      %s107 = ssub.s32 %s24, %s36
      %s108 = ssub.s32 %s25, %s32
      %s109 = sor.u32 %s107, %s108
      %p110 = scmp.eq.s32.totalorder %s109, 0
      %s112 = sadd.s32 %s111, 1
      %s113 = scalar_select %p110, %s111, %s112
      %p116 = pneg %p110
      %p117 = scmp.eq.s32.totalorder %s17, 1
      %p118 = por %p116, %p117
      %p119 = scmp.ne.s32.totalorder %s111, %s114
      %p120 = scmp.eq.s32.totalorder %s17, 0
      %p121 = por %p119, %p120
      %p122 = scmp.ne.s32.totalorder %s111, %s114
      %p123 = scmp.eq.s32.totalorder %s22, 1
      %p124 = por %p122, %p123
      %p125 = scmp.ne.s32.totalorder %s114, %s115
      %p126 = scmp.eq.s32.totalorder %s22, 0
      %p127 = por %p125, %p126
      %p128 = scmp.ne.s32.totalorder %s114, %s115
      %p129 = scmp.eq.s32.totalorder %s23, 1
      %p130 = por %p128, %p129
      %p132 = scmp.ne.s32.totalorder %s115, %s131
      %p133 = scmp.eq.s32.totalorder %s23, 0
      %p134 = por %p132, %p133
      %p135 = scmp.le.s32.totalorder 1, %s17
      %p136 = scmp.lt.s32.totalorder %s17, 3
      %p137 = pnand %p135, %p136
      %p138 = pneg %p137
      // Predicated region
      $region9: #{tpu_custom_call.1} parent=5 // pred_check
        _
      $region10: #{tpu_custom_call.1} parent=5 // pred_check_branch
        %140 = sbr.rel (%p137) target = $region12
      $region11: #{tpu_custom_call.1} parent=5 // pred_region
        %s141 = ssub.s32 %s17, 1
        // Predicated region
        $region13: #{tpu_custom_call.1} parent=11 // pred_check
          %p142 = pneg %p50
        $region14: #{tpu_custom_call.1} parent=11 // pred_check_branch
          %144 = sbr.rel (%p142) target = $region16
        $region15: #{tpu_custom_call.1} parent=11 // pred_region
          %146 = vsyncadd [#allocation5], 0
          %s148 = sshll.u32 %s0, 4
          %s149 = int_to_ptr.hbm [resolvable:$true] %s148
          %151 = dma.hbm_to_smem %s149, 64, [#allocation2], [#allocation5]
        $region16: #{tpu_custom_call.1} parent=11 // pred_fallthru
          _
        // Predicated region
        $region17: #{tpu_custom_call.1} parent=11 // pred_check
          %p152 = pneg %p71
        $region18: #{tpu_custom_call.1} parent=11 // pred_check_branch
          %154 = sbr.rel (%p152) target = $region20
        $region19: #{tpu_custom_call.1} parent=11 // pred_region
          %156 = vsyncadd [#allocation7], 0
          %s158 = sshll.u32 %s1, 4
          %s159 = int_to_ptr.hbm [resolvable:$true] %s158
          %161 = dma.hbm_to_smem %s159, 64, [#allocation6], [#allocation7]
        $region20: #{tpu_custom_call.1} parent=11 // pred_fallthru
          _
      $region12: #{tpu_custom_call.1} parent=5 // pred_fallthru
        _
      %p162 = scmp.lt.s32.totalorder %s17, 2
      // Predicated region
      $region21: #{tpu_custom_call.1} parent=5 // pred_check
        %p163 = pneg %p162
      $region22: #{tpu_custom_call.1} parent=5 // pred_check_branch
        %165 = sbr.rel (%p163) target = $region24
      $region23: #{tpu_custom_call.1} parent=5 // pred_region
        // Predicated region
        $region25: #{tpu_custom_call.1} parent=23 // pred_check
          %p166 = pneg %p93
        $region26: #{tpu_custom_call.1} parent=23 // pred_check_branch
          %168 = sbr.rel (%p166) target = $region28
        $region27: #{tpu_custom_call.1} parent=23 // pred_region
          %s169 = sand.u32 %s83, 1
          %s170 = scalar_lea.sflag [#allocation3], %s169
          %s171 = sand.u32 %s83, 1
          %s172 = smul.addr %s171, 8
          %s173 = scalar_lea.vmem [#allocation8], %s172
          %s174 = smul.u32 2, %s25
          %176 = vsyncadd %s170, 0
          %s177 = smul.addr %s24, 2
          %s178 = sadd.s32 %s174, %s177
          %s179 = smul.addr %s178, 4
          %s180 = scalar_lea.hbm %s2, %s179
          %s182 = sshll.u32 %s180, 4
          %s183 = int_to_ptr.hbm [resolvable:$true] %s182
          %s184 = sshll.u32 %s173, 4
          %s185 = int_to_ptr.vmem [resolvable:$true] %s184
          %187 = dma.hbm_to_vmem [thread:$0]  %s183, 128, %s185, %s170
        $region28: #{tpu_custom_call.1} parent=23 // pred_fallthru
          _
      $region24: #{tpu_custom_call.1} parent=5 // pred_fallthru
        _
      %p188 = scmp.le.s32.totalorder 1, %s17
      %p189 = scmp.lt.s32.totalorder %s17, 3
      %p190 = pnand %p188, %p189
      %p191 = pneg %p190
      // Predicated region
      $region29: #{tpu_custom_call.1} parent=5 // pred_check
        _
      $region30: #{tpu_custom_call.1} parent=5 // pred_check_branch
        %193 = sbr.rel (%p190) target = $region32
      $region31: #{tpu_custom_call.1} parent=5 // pred_region
        %s194 = ssub.s32 %s17, 1
        // Predicated region
        $region33: #{tpu_custom_call.1} parent=31 // pred_check
          %p195 = pneg %p50
        $region34: #{tpu_custom_call.1} parent=31 // pred_check_branch
          %197 = sbr.rel (%p195) target = $region36
        $region35: #{tpu_custom_call.1} parent=31 // pred_region
          %199 = dma.done [#allocation5], 64
        $region36: #{tpu_custom_call.1} parent=31 // pred_fallthru
          _
        // Predicated region
        $region37: #{tpu_custom_call.1} parent=31 // pred_check
          %p200 = pneg %p71
        $region38: #{tpu_custom_call.1} parent=31 // pred_check_branch
          %202 = sbr.rel (%p200) target = $region40
        $region39: #{tpu_custom_call.1} parent=31 // pred_region
          %204 = dma.done [#allocation7], 64
        $region40: #{tpu_custom_call.1} parent=31 // pred_fallthru
          _
        %s205 = sand.u32 %s86, 1
        %s206 = scalar_lea.sflag [#allocation3], %s205
        %s207 = sand.u32 %s86, 1
        %s208 = smul.addr %s207, 8
        %s209 = scalar_lea.vmem [#allocation8], %s208
        // Predicated region
        $region41: #{tpu_custom_call.1} parent=31 // pred_check
          %p210 = pneg %p99
        $region42: #{tpu_custom_call.1} parent=31 // pred_check_branch
          %212 = sbr.rel (%p210) target = $region44
        $region43: #{tpu_custom_call.1} parent=31 // pred_region
          %214 = dma.done %s206, 128
        $region44: #{tpu_custom_call.1} parent=31 // pred_fallthru
          _
        %215 = sfence
        %p216 = pneg %p50
        %p217 = pneg %p47
        %p218 = pneg %p71
        %p219 = pneg %p68
        %s220 = sand.u32 %s86, 1
        %s221 = scalar_lea.sflag [#allocation3], %s220
        %s222 = sand.u32 %s86, 1
        %s223 = smul.addr %s222, 8
        %s224 = scalar_lea.vmem [#allocation8], %s223
        %p225 = pneg %p99
        %p226 = pneg %p96
        %p227 = pneg %p127
        %p228 = pneg %p124
        %s229 = sand.u32 %s114, 1
        %s230 = scalar_lea.sflag [#allocation4], %s229
        %s231 = sand.u32 %s114, 1
        %s232 = smul.addr %s231, 8
        %s233 = scalar_lea.vmem [#allocation9], %s232
        %s234 = smul.u32 2, %s27
        %s235 = smul.u32 2, %s27
        %v236 = vld [vmem:[%s209] sm:$0xff]
        %s237 = sld [smem:[#allocation2]]
        %v238 = vstv %s237
        %v239 = vmul.f32 %v238, %v236
        %s240 = sld [smem:[#allocation2 + $0x1]]
        %v241 = vstv %s240
        %v242 = vmul.f32 %v241, %v236
        %v244 = vrot.slane %v242, 5
        %v245 = vrot.slane %v244, 4
        %v247 = vadd.f32 %v239, %v245
        %s248 = sld [smem:[#allocation2 + $0x2]]
        %v249 = vstv %s248
        %v250 = vmul.f32 %v249, %v236
        %v252 = vrot.slane %v250, 6
        %v253 = vrot.slane %v252, 4
        %v255 = vadd.f32 %v247, %v253
        %s256 = sld [smem:[#allocation2 + $0x3]]
        %v257 = vstv %s256
        %v258 = vmul.f32 %v257, %v236
        %v260 = vrot.slane %v258, 7
        %v261 = vrot.slane %v260, 4
        %v263 = vadd.f32 %v255, %v261
        %v264 = vmax.f32 %v263, 0.0
        %s265 = sld [smem:[#allocation2 + $0x80]]
        %v266 = vstv %s265
        %v267 = vmul.f32 %v266, %v236
        %s268 = sld [smem:[#allocation2 + $0x81]]
        %v269 = vstv %s268
        %v270 = vmul.f32 %v269, %v236
        %v272 = vrot.slane %v270, 5
        %v273 = vrot.slane %v272, 4
        %v275 = vadd.f32 %v267, %v273
        %s276 = sld [smem:[#allocation2 + $0x82]]
        %v277 = vstv %s276
        %v278 = vmul.f32 %v277, %v236
        %v280 = vrot.slane %v278, 6
        %v281 = vrot.slane %v280, 4
        %v283 = vadd.f32 %v275, %v281
        %s284 = sld [smem:[#allocation2 + $0x83]]
        %v285 = vstv %s284
        %v286 = vmul.f32 %v285, %v236
        %v288 = vrot.slane %v286, 7
        %v289 = vrot.slane %v288, 4
        %v291 = vadd.f32 %v283, %v289
        %v292 = vmax.f32 %v291, 0.0
        %s293 = sld [smem:[#allocation2 + $0x100]]
        %v294 = vstv %s293
        %v295 = vmul.f32 %v294, %v236
        %s296 = sld [smem:[#allocation2 + $0x101]]
        %v297 = vstv %s296
        %v298 = vmul.f32 %v297, %v236
        %v300 = vrot.slane %v298, 5
        %v301 = vrot.slane %v300, 4
        %v303 = vadd.f32 %v295, %v301
        %s304 = sld [smem:[#allocation2 + $0x102]]
        %v305 = vstv %s304
        %v306 = vmul.f32 %v305, %v236
        %v308 = vrot.slane %v306, 6
        %v309 = vrot.slane %v308, 4
        %v311 = vadd.f32 %v303, %v309
        %s312 = sld [smem:[#allocation2 + $0x103]]
        %v313 = vstv %s312
        %v314 = vmul.f32 %v313, %v236
        %v316 = vrot.slane %v314, 7
        %v317 = vrot.slane %v316, 4
        %v319 = vadd.f32 %v311, %v317
        %v320 = vmax.f32 %v319, 0.0
        %s321 = sld [smem:[#allocation2 + $0x180]]
        %v322 = vstv %s321
        %v323 = vmul.f32 %v322, %v236
        %s324 = sld [smem:[#allocation2 + $0x181]]
        %v325 = vstv %s324
        %v326 = vmul.f32 %v325, %v236
        %v328 = vrot.slane %v326, 5
        %v329 = vrot.slane %v328, 4
        %v331 = vadd.f32 %v323, %v329
        %s332 = sld [smem:[#allocation2 + $0x182]]
        %v333 = vstv %s332
        %v334 = vmul.f32 %v333, %v236
        %v336 = vrot.slane %v334, 6
        %v337 = vrot.slane %v336, 4
        %v339 = vadd.f32 %v331, %v337
        %s340 = sld [smem:[#allocation2 + $0x183]]
        %v341 = vstv %s340
        %v342 = vmul.f32 %v341, %v236
        %v344 = vrot.slane %v342, 7
        %v345 = vrot.slane %v344, 4
        %v347 = vadd.f32 %v339, %v345
        %v348 = vmax.f32 %v347, 0.0
        %s349 = sld [smem:[#allocation6]]
        %v350 = vstv %s349
        %v351 = vmul.f32 %v350, %v264
        %s352 = sld [smem:[#allocation6 + $0x1]]
        %v353 = vstv %s352
        %v354 = vmul.f32 %v353, %v292
        %v355 = vadd.f32 %v351, %v354
        %s356 = sld [smem:[#allocation6 + $0x2]]
        %v357 = vstv %s356
        %v358 = vmul.f32 %v357, %v320
        %v359 = vadd.f32 %v355, %v358
        %s360 = sld [smem:[#allocation6 + $0x3]]
        %v361 = vstv %s360
        %v362 = vmul.f32 %v361, %v348
        %v363 = vadd.f32 %v359, %v362
        %s364 = sld [smem:[#allocation6 + $0x80]]
        %v365 = vstv %s364
        %v366 = vmul.f32 %v365, %v264
        %s367 = sld [smem:[#allocation6 + $0x81]]
        %v368 = vstv %s367
        %v369 = vmul.f32 %v368, %v292
        %v370 = vadd.f32 %v366, %v369
        %s371 = sld [smem:[#allocation6 + $0x82]]
        %v372 = vstv %s371
        %v373 = vmul.f32 %v372, %v320
        %v374 = vadd.f32 %v370, %v373
        %s375 = sld [smem:[#allocation6 + $0x83]]
        %v376 = vstv %s375
        %v377 = vmul.f32 %v376, %v348
        %v378 = vadd.f32 %v374, %v377
        %s379 = sld [smem:[#allocation6 + $0x100]]
        %v380 = vstv %s379
        %v381 = vmul.f32 %v380, %v264
        %s382 = sld [smem:[#allocation6 + $0x101]]
        %v383 = vstv %s382
        %v384 = vmul.f32 %v383, %v292
        %v385 = vadd.f32 %v381, %v384
        %s386 = sld [smem:[#allocation6 + $0x102]]
        %v387 = vstv %s386
        %v388 = vmul.f32 %v387, %v320
        %v389 = vadd.f32 %v385, %v388
        %s390 = sld [smem:[#allocation6 + $0x103]]
        %v391 = vstv %s390
        %v392 = vmul.f32 %v391, %v348
        %v393 = vadd.f32 %v389, %v392
        %s394 = sld [smem:[#allocation6 + $0x180]]
        %v395 = vstv %s394
        %v396 = vmul.f32 %v395, %v264
        %s397 = sld [smem:[#allocation6 + $0x181]]
        %v398 = vstv %s397
        %v399 = vmul.f32 %v398, %v292
        %v400 = vadd.f32 %v396, %v399
        %s401 = sld [smem:[#allocation6 + $0x182]]
        %v402 = vstv %s401
        %v403 = vmul.f32 %v402, %v320
        %v404 = vadd.f32 %v400, %v403
        %s405 = sld [smem:[#allocation6 + $0x183]]
        %v406 = vstv %s405
        %v407 = vmul.f32 %v406, %v348
        %v408 = vadd.f32 %v404, %v407
        %v409 = vmax.f32 %v363, %v378
        %v410 = vmax.f32 %v409, %v393
        %v411 = vmax.f32 %v410, %v408
        %v412 = vsub.f32 %v363, %v411
        %v413 = vmul.f32 %v412, 1.442695
        %v414 = vpow.pop %v413
        %v415 = vsub.f32 %v378, %v411
        %v416 = vmul.f32 %v415, 1.442695
        %v417 = vpow.pop %v416
        %v418 = vsub.f32 %v393, %v411
        %v419 = vmul.f32 %v418, 1.442695
        %v420 = vpow.pop %v419
        %v421 = vsub.f32 %v408, %v411
        %v422 = vmul.f32 %v421, 1.442695
        %v423 = vpow.pop %v422
        %v424 = vadd.f32 %v414, %v417
        %v425 = vadd.f32 %v424, %v420
        %v426 = vadd.f32 %v425, %v423
        %v427 = vrcp.pop %v426
        %v428 = vmul.f32 %v426, %v427
        %v429 = vsub.f32 2.0, %v428
        %v430 = vmul.f32 %v427, %v429
        %v431 = vmul.f32 %v414, %v430
        %v433 = vrot.slane %v431, 3
        %vm434 = vcmask 1040384
        %v435 = vsel %vm434, %v431, %v433
        %v437 = vlaneseq
        %vm438 = vcmp.ge.s32.totalorder %v437, 0
        %vm439 = vcmp.lt.s32.totalorder %v437, 256
        %vm440 = vmand %vm438, %vm439
        %441 = vst.msk [vmem:[%s233] ss:$4 sm:$0x3] %vm440, %v435
        %v442 = vmul.f32 %v417, %v430
        %v444 = vrot.slane %v442, 3
        %v445 = vsel %vm434, %v442, %v444
        %s447 = scalar_lea.vmem %s233, 1 [#allocation9]
        %448 = vst.msk [vmem:[%s447] ss:$4 sm:$0x3] %vm440, %v445
        %v449 = vmul.f32 %v420, %v430
        %v451 = vrot.slane %v449, 3
        %v452 = vsel %vm434, %v449, %v451
        %s454 = scalar_lea.vmem %s233, 2 [#allocation9]
        %455 = vst.msk [vmem:[%s454] ss:$4 sm:$0x3] %vm440, %v452
        %v456 = vmul.f32 %v423, %v430
        %v458 = vrot.slane %v456, 3
        %v459 = vsel %vm434, %v456, %v458
        %s461 = scalar_lea.vmem %s233, 3 [#allocation9]
        %462 = vst.msk [vmem:[%s461] ss:$4 sm:$0x3] %vm440, %v459
        %s463 = sand.u32 %s114, 1
        %s464 = scalar_lea.sflag [#allocation4], %s463
        %s465 = sand.u32 %s114, 1
        %s466 = smul.addr %s465, 8
        %s467 = scalar_lea.vmem [#allocation9], %s466
        // Predicated region
        $region45: #{tpu_custom_call.1} parent=31 // pred_check
          %p468 = pneg %p124
        $region46: #{tpu_custom_call.1} parent=31 // pred_check_branch
          %470 = sbr.rel (%p468) target = $region48
        $region47: #{tpu_custom_call.1} parent=31 // pred_region
          %s471 = smul.u32 2, %s27
          %473 = vsyncadd %s464, 0
          %s474 = smul.addr %s26, 2
          %s475 = sadd.s32 %s471, %s474
          %s476 = smul.addr %s475, 4
          %s477 = scalar_lea.hbm %s3, %s476
          %s479 = sshll.u32 %s467, 4
          %s480 = int_to_ptr.vmem [resolvable:$true] %s479
          %s481 = sshll.u32 %s477, 4
          %s482 = int_to_ptr.hbm [resolvable:$true] %s481
          %484 = dma.vmem_to_hbm [thread:$0]  %s480, 128, %s482, %s464
        $region48: #{tpu_custom_call.1} parent=31 // pred_fallthru
          _
      $region32: #{tpu_custom_call.1} parent=5 // pred_fallthru
        _
      %p485 = scmp.le.s32.totalorder 2, %s17
      // Predicated region
      $region49: #{tpu_custom_call.1} parent=5 // pred_check
        %p486 = pneg %p485
      $region50: #{tpu_custom_call.1} parent=5 // pred_check_branch
        %488 = sbr.rel (%p486) target = $region52
      $region51: #{tpu_custom_call.1} parent=5 // pred_region
        %s489 = ssub.s32 %s17, 2
        // Predicated region
        $region53: #{tpu_custom_call.1} parent=51 // pred_check
          %p490 = pneg %p130
        $region54: #{tpu_custom_call.1} parent=51 // pred_check_branch
          %492 = sbr.rel (%p490) target = $region56
        $region55: #{tpu_custom_call.1} parent=51 // pred_region
          %s493 = sand.u32 %s115, 1
          %s494 = scalar_lea.sflag [#allocation4], %s493
          %s495 = sand.u32 %s115, 1
          %s496 = smul.addr %s495, 8
          %s497 = scalar_lea.vmem [#allocation9], %s496
          %499 = dma.done %s494, 128
        $region56: #{tpu_custom_call.1} parent=51 // pred_fallthru
          _
      $region52: #{tpu_custom_call.1} parent=5 // pred_fallthru
        _
    $region6: #{tpu_custom_call.1} parent=1 // loop_footer
      %s21 = sadd.s32 1, %s17
    $region7: #{tpu_custom_call.1} parent=1 // loop_footer_branch
      %16 = sbr.rel target = $region3
    $region8: #{tpu_custom_call.1} parent=1 // loop_exit
      _
    %500 = vsyncpa [#allocation3], 1
    %s501 = scalar_lea.sflag [#allocation3], 1
    %502 = vsyncpa %s501, 1
    %503 = vsyncpa [#allocation4], 1
    %s504 = scalar_lea.sflag [#allocation4], 1
    %505 = vsyncpa %s504, 1
    %506 = vsyncpa [#allocation5], 1
    %s507 = scalar_lea.sflag [#allocation5], 1
    %508 = vsyncpa %s507, 1
    %509 = vsyncpa [#allocation7], 1

</llo_original>
